<compile_context>
chip_gen: v7x
topology: tpu7x:2x2x1
jax: 0.10.0
libtpu: 0.0.40
codegen_flags: <defaults>
</compile_context>

<pallas_src>
import jax
import jax.numpy as jnp
from jax.experimental import pallas as pl
from jax.experimental.pallas import tpu as pltpu

EPS = 1e-5          # nn.BatchNorm2d default eps
_LANES = 128        # lane width
_CH = 32            # rows (of 128 lanes) per in-kernel vreg chunk
_TARGET_X_BLOCK_BYTES = 4 << 20   # ~4 MiB of x per grid step (good on v5e/v6e/v7x)


def _cdiv(a, b):
    return -(-a // b)


def _round_up(a, b):
    return _cdiv(a, b) * b


def _choose_tiling(hw, cin, itemsize):
    """Returns (rows, tr, ch, n_chunks): padded row count, rows per DMA block,
    rows per in-kernel chunk, chunks per block."""
    rows_raw = _cdiv(hw, _LANES)
    if rows_raw <= _CH:
        return rows_raw, rows_raw, rows_raw, 1
    row_bytes = cin * _LANES * itemsize
    tr_target = max(_CH, ((_TARGET_X_BLOCK_BYTES // row_bytes) // _CH) * _CH)
    nb = _cdiv(rows_raw, tr_target)               # number of row blocks
    tr = _round_up(_cdiv(rows_raw, nb), _CH)      # even split, chunk-aligned
    rows = nb * tr                                # small pad (<= nb*(_CH) rows)
    return rows, tr, _CH, tr // _CH


def _make_stats_kernel(cin, cmid, ch, n_chunks):
    """Phase 1: conv1 on a (Cin, TR, 128) tile; accumulate sum / sumsq of the
    conv1 output per mid channel into the per-batch resident stats block."""

    def kernel(x_ref, w1_ref, b1_ref, stats_ref):
        @pl.when(pl.program_id(1) == 0)
        def _init():
            stats_ref[...] = jnp.zeros_like(stats_ref)

        # Hoist SMEM scalar reads out of the chunk loop (no per-iter re-broadcast).
        w1 = [[w1_ref[cm, ci] for ci in range(cin)] for cm in range(cmid)]
        b1 = [b1_ref[cm] for cm in range(cmid)]

        def body(c, carry):
            s_acc, q_acc = carry
            r0 = pl.multiple_of(c * ch, ch)
            xs = [x_ref[ci, pl.ds(r0, ch), :].astype(jnp.float32)
                  for ci in range(cin)]                      # cin x (ch, 128)
            s_new, q_new = [], []
            for cm in range(cmid):
                h = xs[0] * w1[cm][0]
                for ci in range(1, cin):
                    h = h + xs[ci] * w1[cm][ci]
                h = h + b1[cm]
                s_new.append(s_acc[cm] + h)
                q_new.append(q_acc[cm] + h * h)
            return tuple(s_new), tuple(q_new)

        zeros = tuple(jnp.zeros((ch, _LANES), jnp.float32) for _ in range(cmid))
        s_acc, q_acc = jax.lax.fori_loop(0, n_chunks, body, (zeros, zeros))

        # Single read-modify-write per mid channel per grid step.
        for cm in range(cmid):
            stats_ref[cm] += s_acc[cm]
            stats_ref[cmid + cm] += q_acc[cm]

    return kernel


def _make_apply_kernel(cin, cmid, cout, ch, n_chunks):
    """Phase 2: folded-BN conv1 -> ReLU -> conv2 on a (Cin, TR, 128) tile;
    lane/sublane-dense (Cout, TR, 128) store."""

    def kernel(x_ref, w1_ref, b1_ref, w2_ref, b2_ref, o_ref):
        w1 = [[w1_ref[cm, ci] for ci in range(cin)] for cm in range(cmid)]
        b1 = [b1_ref[cm] for cm in range(cmid)]
        w2 = [[w2_ref[co, cm] for cm in range(cmid)] for co in range(cout)]
        b2 = [b2_ref[co] for co in range(cout)]

        @pl.loop(0, n_chunks)
        def _(c):
            r0 = pl.multiple_of(c * ch, ch)
            xs = [x_ref[ci, pl.ds(r0, ch), :].astype(jnp.float32)
                  for ci in range(cin)]
            hs = []
            for cm in range(cmid):
                h = xs[0] * w1[cm][0]
                for ci in range(1, cin):
                    h = h + xs[ci] * w1[cm][ci]
                hs.append(jnp.maximum(h + b1[cm], 0.0))      # folded-BN + ReLU
            for co in range(cout):
                y = hs[0] * w2[co][0]
                for cm in range(1, cmid):
                    y = y + hs[cm] * w2[co][cm]
                o_ref[co, pl.ds(r0, ch), :] = (y + b2[co]).astype(o_ref.dtype)

    return kernel


def out_conv(x_nchw, w1, b1, gamma, beta, w2, b2, *, eps=EPS):
    """Forward pass of OutConv.

    x_nchw : (N, Cin, H, W)
    w1     : (Cmid, Cin)   -- 1x1 conv1 weight (PyTorch (out,in,1,1) squeezed)
    b1     : (Cmid,)
    gamma  : (Cmid,)       -- BatchNorm2d weight
    beta   : (Cmid,)       -- BatchNorm2d bias
    w2     : (Cout, Cmid)  -- 1x1 conv2 weight
    b2     : (Cout,)
    """
    n, cin, hgt, wid = x_nchw.shape
    cmid = w1.shape[0]
    cout = w2.shape[0]
    hw = hgt * wid
    f32 = jnp.float32
    itemsize = int(x_nchw.dtype.itemsize)

    rows, tr, ch, n_chunks = _choose_tiling(hw, cin, itemsize)
    hw_pad = rows * _LANES
    n_t = rows // tr
    grid = (n, n_t)
    m_total = n * hw
    m_pad_total = n * hw_pad

    # Sublane/lane-dense layout: pure reshape; zero-pad flat spatial axis only if
    # hw is not already a multiple of the chosen (rows * 128) extent.
    x3 = x_nchw.reshape(n, cin, hw)
    if hw_pad != hw:
        x3 = jnp.pad(x3, ((0, 0), (0, 0), (0, hw_pad - hw)))
    x4 = x3.reshape(n, cin, rows, _LANES)

    x_spec = pl.BlockSpec((None, cin, tr, _LANES), lambda b, t: (b, 0, t, 0))
    smem_spec = pl.BlockSpec(memory_space=pltpu.MemorySpace.SMEM)

    # Honest, sublane-padded VMEM budget: double-buffered x block + double-
    # buffered (output | stats) block + headroom; capped at 32 MiB for v7x.
    tr_pad = _round_up(tr, 8)
    ch_pad = _round_up(ch, 8)
    xblk = cin * tr_pad * _LANES * itemsize
    oblk = cout * tr_pad * _LANES * itemsize
    sblk = 2 * cmid * ch_pad * _LANES * 4
    vmem_bytes = int(min(2 * xblk + 2 * max(oblk, sblk) + (4 << 20), 32 << 20))

    w1f, b1f = w1.astype(f32), b1.astype(f32)
    w2f, b2f = w2.astype(f32), b2.astype(f32)

    # ---- Phase 1: per-mid-channel sum / sumsq of the conv1 output -------------
    # Leading batch axis on the output (marked "parallel") lets v7x split phase 1
    # across both TensorCores; the axis is reduced in the JAX epilogue.
    stats = pl.pallas_call(
        _make_stats_kernel(cin, cmid, ch, n_chunks),
        out_shape=jax.ShapeDtypeStruct((n, 2 * cmid, ch, _LANES), f32),
        grid=grid,
        in_specs=[x_spec, smem_spec, smem_spec],
        out_specs=pl.BlockSpec((None, 2 * cmid, ch, _LANES),
                               lambda b, t: (b, 0, 0, 0)),
        compiler_params=pltpu.CompilerParams(
            dimension_semantics=("parallel", "arbitrary"),
            vmem_limit_bytes=vmem_bytes,
        ),
        cost_estimate=pl.CostEstimate(
            flops=int(m_pad_total * cmid * (2 * cin + 4)),
            transcendentals=0,
            bytes_accessed=int(m_pad_total * cin * itemsize
                               + n * 2 * cmid * ch * _LANES * 4),
        ),
    )(x4, w1f, b1f)

    # Tiny JAX epilogue: finalize training-mode BN stats and fold BN into conv1.
    s = jnp.sum(stats[:, :cmid], axis=(0, 2, 3))
    ss = jnp.sum(stats[:, cmid:], axis=(0, 2, 3))
    pad_cnt = jnp.float32(m_pad_total - m_total)
    s = s - pad_cnt * b1f                   # padded x==0 -> conv1 output == b1
    ss = ss - pad_cnt * b1f * b1f
    mean = s / m_total
    # TODO(synk): E[h^2]-mean^2 can catastrophically cancel for extreme |mean|/std;
    # switch to a shifted / Welford combine if production magnitudes require it.
    var = jnp.maximum(ss / m_total - mean * mean, 0.0)   # biased (training-mode)
    inv = jax.lax.rsqrt(var + eps)
    scale = gamma.astype(f32) * inv
    shift = beta.astype(f32) - mean * scale
    w1_eff = w1f * scale[:, None]            # BN folded into conv1
    b1_eff = b1f * scale + shift

    # ---- Phase 2: (folded-BN conv1) -> ReLU -> conv2, streamed, lane-dense ----
    y4 = pl.pallas_call(
        _make_apply_kernel(cin, cmid, cout, ch, n_chunks),
        out_shape=jax.ShapeDtypeStruct((n, cout, rows, _LANES), x_nchw.dtype),
        grid=grid,
        in_specs=[x_spec, smem_spec, smem_spec, smem_spec, smem_spec],
        out_specs=pl.BlockSpec((None, cout, tr, _LANES),
                               lambda b, t: (b, 0, t, 0)),
        compiler_params=pltpu.CompilerParams(
            dimension_semantics=("parallel", "parallel"),
            vmem_limit_bytes=vmem_bytes,
        ),
        cost_estimate=pl.CostEstimate(
            flops=int(m_pad_total * (2 * cin * cmid + cmid + 2 * cmid * cout)),
            transcendentals=0,
            bytes_accessed=int(m_pad_total * (cin + cout) * itemsize),
        ),
    )(x4, w1_eff, b1_eff, w2f, b2f)

    y = y4.reshape(n, cout, hw_pad)
    if hw_pad != hw:
        y = y[:, :, :hw]
    return y.reshape(n, cout, hgt, wid)


def _reference(x, w1, b1, gamma, beta, w2, b2, eps=EPS):
    """Pure-JAX reference matching PyTorch training-mode forward."""
    h = jnp.einsum("oc,nchw->nohw", w1, x) + b1[None, :, None, None]
    mean = h.mean(axis=(0, 2, 3), keepdims=True)
    var = ((h - mean) ** 2).mean(axis=(0, 2, 3), keepdims=True)  # biased
    hn = (h - mean) * jax.lax.rsqrt(var + eps)
    hn = hn * gamma[None, :, None, None] + beta[None, :, None, None]
    hn = jnp.maximum(hn, 0.0)
    return jnp.einsum("oc,nchw->nohw", w2, hn) + b2[None, :, None, None]


def init_params(key, in_channels, out_channels):
    """Deterministic synthetic parameters matching the PyTorch module shapes."""
    mid = in_channels // 2
    k1, k2, k3, k4 = jax.random.split(key, 4)
    w1 = jax.random.normal(k1, (mid, in_channels), jnp.float32) / jnp.sqrt(in_channels)
    b1 = jax.random.normal(k2, (mid,), jnp.float32) * 0.1
    gamma = jnp.ones((mid,), jnp.float32)      # BatchNorm2d init
    beta = jnp.zeros((mid,), jnp.float32)
    w2 = jax.random.normal(k3, (out_channels, mid), jnp.float32) / jnp.sqrt(mid)
    b2 = jax.random.normal(k4, (out_channels,), jnp.float32) * 0.1
    return w1, b1, gamma, beta, w2, b2


if __name__ == "__main__":
    key = jax.random.PRNGKey(0)
    kx, kp = jax.random.split(key)

    N, Cin, H, W = 2, 4, 16, 16
    Cout = 3

    x = jax.random.normal(kx, (N, Cin, H, W), jnp.float32)
    params = init_params(kp, Cin, Cout)

    y = out_conv(x, *params)
    jax.block_until_ready(y)
    assert y.shape == (N, Cout, H, W), y.shape

    y_ref = _reference(x, *params)
    max_err = float(jnp.max(jnp.abs(y - y_ref)))
    assert jnp.allclose(y, y_ref, rtol=1e-4, atol=1e-4), f"max abs err {max_err}"

    print("KERNEL_OK")
</pallas_src>

<mosaic_0001>
module attributes {stable_mosaic.version = 11 : i64} {
  func.func @kernel(%arg0: i32, %arg1: i32, %arg2: memref<1x4x2x128xf32, #tpu.memory_space<vmem>>, %arg3: memref<2x4xf32, #tpu.memory_space<smem>>, %arg4: memref<2xf32, #tpu.memory_space<smem>>, %arg5: memref<1x4x2x128xf32, #tpu.memory_space<vmem>>) attributes {dimension_semantics = [#tpu.dimension_semantics<parallel>, #tpu.dimension_semantics<arbitrary>], iteration_bounds = array<i64: 2, 1>, scalar_prefetch = 0 : i64, scratch_operands = 0 : i64, tpu.core_type = #tpu.core_type<tc>, window_params = [{transform_indices = @transform_0, window_bounds = array<i64: 1, 4, 2, 128>}, {transform_indices = @transform_1, window_bounds = array<i64: 2, 4>}, {transform_indices = @transform_2, window_bounds = array<i64: 2>}, {transform_indices = @transform_3, window_bounds = array<i64: 1, 4, 2, 128>}]} {
    %c0_i32 = arith.constant 0 : i32
    %0 = arith.cmpi eq, %arg1, %c0_i32 : i32
    %1 = arith.extui %0 : i1 to i32
    %c0_i32_0 = arith.constant 0 : i32
    %2 = arith.cmpi ne, %1, %c0_i32_0 : i32
    scf.if %2 {
      %cst_61 = arith.constant 0.000000e+00 : f32
      %85 = vector.broadcast %cst_61 : f32 to vector<4x2x128xf32>
      %c0_62 = arith.constant 0 : index
      %c0_63 = arith.constant 0 : index
      %c0_64 = arith.constant 0 : index
      %c0_65 = arith.constant 0 : index
      %86 = vector.load %arg5[%c0_62, %c0_63, %c0_64, %c0_65] : memref<1x4x2x128xf32, #tpu.memory_space<vmem>>, vector<1x4x2x128xf32>
      %87 = vector.shape_cast %86 : vector<1x4x2x128xf32> to vector<4x2x128xf32>
      %88 = vector.shape_cast %85 : vector<4x2x128xf32> to vector<1x4x2x128xf32>
      tpu.vector_store %arg5[%c0_62, %c0_63, %c0_64, %c0_65], %88 {strides = array<i32>} : memref<1x4x2x128xf32, #tpu.memory_space<vmem>>, vector<1x4x2x128xf32>,
    } else {
    }
    %c0 = arith.constant 0 : index
    %c0_1 = arith.constant 0 : index
    %3 = memref.load %arg3[%c0, %c0_1] : memref<2x4xf32, #tpu.memory_space<smem>>
    %c0_2 = arith.constant 0 : index
    %c1 = arith.constant 1 : index
    %4 = memref.load %arg3[%c0_2, %c1] : memref<2x4xf32, #tpu.memory_space<smem>>
    %c0_3 = arith.constant 0 : index
    %c2 = arith.constant 2 : index
    %5 = memref.load %arg3[%c0_3, %c2] : memref<2x4xf32, #tpu.memory_space<smem>>
    %c0_4 = arith.constant 0 : index
    %c3 = arith.constant 3 : index
    %6 = memref.load %arg3[%c0_4, %c3] : memref<2x4xf32, #tpu.memory_space<smem>>
    %c1_5 = arith.constant 1 : index
    %c0_6 = arith.constant 0 : index
    %7 = memref.load %arg3[%c1_5, %c0_6] : memref<2x4xf32, #tpu.memory_space<smem>>
    %c1_7 = arith.constant 1 : index
    %c1_8 = arith.constant 1 : index
    %8 = memref.load %arg3[%c1_7, %c1_8] : memref<2x4xf32, #tpu.memory_space<smem>>
    %c1_9 = arith.constant 1 : index
    %c2_10 = arith.constant 2 : index
    %9 = memref.load %arg3[%c1_9, %c2_10] : memref<2x4xf32, #tpu.memory_space<smem>>
    %c1_11 = arith.constant 1 : index
    %c3_12 = arith.constant 3 : index
    %10 = memref.load %arg3[%c1_11, %c3_12] : memref<2x4xf32, #tpu.memory_space<smem>>
    %c0_13 = arith.constant 0 : index
    %11 = memref.load %arg4[%c0_13] : memref<2xf32, #tpu.memory_space<smem>>
    %c1_14 = arith.constant 1 : index
    %12 = memref.load %arg4[%c1_14] : memref<2xf32, #tpu.memory_space<smem>>
    %cst = arith.constant 0.000000e+00 : f32
    %13 = vector.broadcast %cst : f32 to vector<2x128xf32>
    %cst_15 = arith.constant 0.000000e+00 : f32
    %14 = vector.broadcast %cst_15 : f32 to vector<2x128xf32>
    %c0_i32_16 = arith.constant 0 : i32
    %c2_i32 = arith.constant 2 : i32
    %15 = arith.muli %c0_i32_16, %c2_i32 : i32
    %16 = tpu.assume_multiple %15, 2 : i32
    %c0_17 = arith.constant 0 : index
    %c0_18 = arith.constant 0 : index
    %17 = arith.index_cast %16 : i32 to index
    %c0_19 = arith.constant 0 : index
    %18 = vector.load %arg2[%c0_17, %c0_18, %17, %c0_19] : memref<1x4x2x128xf32, #tpu.memory_space<vmem>>, vector<1x1x2x128xf32>
    %19 = vector.shape_cast %18 : vector<1x1x2x128xf32> to vector<2x128xf32>
    %c0_20 = arith.constant 0 : index
    %c1_21 = arith.constant 1 : index
    %20 = arith.index_cast %16 : i32 to index
    %c0_22 = arith.constant 0 : index
    %21 = vector.load %arg2[%c0_20, %c1_21, %20, %c0_22] : memref<1x4x2x128xf32, #tpu.memory_space<vmem>>, vector<1x1x2x128xf32>
    %22 = vector.shape_cast %21 : vector<1x1x2x128xf32> to vector<2x128xf32>
    %c0_23 = arith.constant 0 : index
    %c2_24 = arith.constant 2 : index
    %23 = arith.index_cast %16 : i32 to index
    %c0_25 = arith.constant 0 : index
    %24 = vector.load %arg2[%c0_23, %c2_24, %23, %c0_25] : memref<1x4x2x128xf32, #tpu.memory_space<vmem>>, vector<1x1x2x128xf32>
    %25 = vector.shape_cast %24 : vector<1x1x2x128xf32> to vector<2x128xf32>
    %c0_26 = arith.constant 0 : index
    %c3_27 = arith.constant 3 : index
    %26 = arith.index_cast %16 : i32 to index
    %c0_28 = arith.constant 0 : index
    %27 = vector.load %arg2[%c0_26, %c3_27, %26, %c0_28] : memref<1x4x2x128xf32, #tpu.memory_space<vmem>>, vector<1x1x2x128xf32>
    %28 = vector.shape_cast %27 : vector<1x1x2x128xf32> to vector<2x128xf32>
    %29 = vector.broadcast %3 : f32 to vector<2x128xf32>
    %30 = arith.mulf %19, %29 : vector<2x128xf32>
    %31 = vector.broadcast %4 : f32 to vector<2x128xf32>
    %32 = arith.mulf %22, %31 : vector<2x128xf32>
    %33 = arith.addf %30, %32 : vector<2x128xf32>
    %34 = vector.broadcast %5 : f32 to vector<2x128xf32>
    %35 = arith.mulf %25, %34 : vector<2x128xf32>
    %36 = arith.addf %33, %35 : vector<2x128xf32>
    %37 = vector.broadcast %6 : f32 to vector<2x128xf32>
    %38 = arith.mulf %28, %37 : vector<2x128xf32>
    %39 = arith.addf %36, %38 : vector<2x128xf32>
    %40 = vector.broadcast %11 : f32 to vector<2x128xf32>
    %41 = arith.addf %39, %40 : vector<2x128xf32>
    %42 = arith.addf %13, %41 : vector<2x128xf32>
    %43 = arith.mulf %41, %41 : vector<2x128xf32>
    %44 = arith.addf %13, %43 : vector<2x128xf32>
    %45 = vector.broadcast %7 : f32 to vector<2x128xf32>
    %46 = arith.mulf %19, %45 : vector<2x128xf32>
    %47 = vector.broadcast %8 : f32 to vector<2x128xf32>
    %48 = arith.mulf %22, %47 : vector<2x128xf32>
    %49 = arith.addf %46, %48 : vector<2x128xf32>
    %50 = vector.broadcast %9 : f32 to vector<2x128xf32>
    %51 = arith.mulf %25, %50 : vector<2x128xf32>
    %52 = arith.addf %49, %51 : vector<2x128xf32>
    %53 = vector.broadcast %10 : f32 to vector<2x128xf32>
    %54 = arith.mulf %28, %53 : vector<2x128xf32>
    %55 = arith.addf %52, %54 : vector<2x128xf32>
    %56 = vector.broadcast %12 : f32 to vector<2x128xf32>
    %57 = arith.addf %55, %56 : vector<2x128xf32>
    %58 = arith.addf %14, %57 : vector<2x128xf32>
    %59 = arith.mulf %57, %57 : vector<2x128xf32>
    %60 = arith.addf %14, %59 : vector<2x128xf32>
    %c1_i32 = arith.constant 1 : i32
    %c0_29 = arith.constant 0 : index
    %c0_30 = arith.constant 0 : index
    %c0_31 = arith.constant 0 : index
    %c0_32 = arith.constant 0 : index
    %61 = vector.load %arg5[%c0_29, %c0_30, %c0_31, %c0_32] : memref<1x4x2x128xf32, #tpu.memory_space<vmem>>, vector<1x1x2x128xf32>
    %62 = vector.shape_cast %61 : vector<1x1x2x128xf32> to vector<2x128xf32>
    %63 = arith.addf %62, %42 : vector<2x128xf32>
    %c0_33 = arith.constant 0 : index
    %c0_34 = arith.constant 0 : index
    %c0_35 = arith.constant 0 : index
    %c0_36 = arith.constant 0 : index
    %64 = vector.load %arg5[%c0_33, %c0_34, %c0_35, %c0_36] : memref<1x4x2x128xf32, #tpu.memory_space<vmem>>, vector<1x1x2x128xf32>
    %65 = vector.shape_cast %64 : vector<1x1x2x128xf32> to vector<2x128xf32>
    %66 = vector.shape_cast %63 : vector<2x128xf32> to vector<1x1x2x128xf32>
    tpu.vector_store %arg5[%c0_33, %c0_34, %c0_35, %c0_36], %66 {strides = array<i32>} : memref<1x4x2x128xf32, #tpu.memory_space<vmem>>, vector<1x1x2x128xf32>,
    %c0_37 = arith.constant 0 : index
    %c2_38 = arith.constant 2 : index
    %c0_39 = arith.constant 0 : index
    %c0_40 = arith.constant 0 : index
    %67 = vector.load %arg5[%c0_37, %c2_38, %c0_39, %c0_40] : memref<1x4x2x128xf32, #tpu.memory_space<vmem>>, vector<1x1x2x128xf32>
    %68 = vector.shape_cast %67 : vector<1x1x2x128xf32> to vector<2x128xf32>
    %69 = arith.addf %68, %44 : vector<2x128xf32>
    %c0_41 = arith.constant 0 : index
    %c2_42 = arith.constant 2 : index
    %c0_43 = arith.constant 0 : index
    %c0_44 = arith.constant 0 : index
    %70 = vector.load %arg5[%c0_41, %c2_42, %c0_43, %c0_44] : memref<1x4x2x128xf32, #tpu.memory_space<vmem>>, vector<1x1x2x128xf32>
    %71 = vector.shape_cast %70 : vector<1x1x2x128xf32> to vector<2x128xf32>
    %72 = vector.shape_cast %69 : vector<2x128xf32> to vector<1x1x2x128xf32>
    tpu.vector_store %arg5[%c0_41, %c2_42, %c0_43, %c0_44], %72 {strides = array<i32>} : memref<1x4x2x128xf32, #tpu.memory_space<vmem>>, vector<1x1x2x128xf32>,
    %c0_45 = arith.constant 0 : index
    %c1_46 = arith.constant 1 : index
    %c0_47 = arith.constant 0 : index
    %c0_48 = arith.constant 0 : index
    %73 = vector.load %arg5[%c0_45, %c1_46, %c0_47, %c0_48] : memref<1x4x2x128xf32, #tpu.memory_space<vmem>>, vector<1x1x2x128xf32>
    %74 = vector.shape_cast %73 : vector<1x1x2x128xf32> to vector<2x128xf32>
    %75 = arith.addf %74, %58 : vector<2x128xf32>
    %c0_49 = arith.constant 0 : index
    %c1_50 = arith.constant 1 : index
    %c0_51 = arith.constant 0 : index
    %c0_52 = arith.constant 0 : index
    %76 = vector.load %arg5[%c0_49, %c1_50, %c0_51, %c0_52] : memref<1x4x2x128xf32, #tpu.memory_space<vmem>>, vector<1x1x2x128xf32>
    %77 = vector.shape_cast %76 : vector<1x1x2x128xf32> to vector<2x128xf32>
    %78 = vector.shape_cast %75 : vector<2x128xf32> to vector<1x1x2x128xf32>
    tpu.vector_store %arg5[%c0_49, %c1_50, %c0_51, %c0_52], %78 {strides = array<i32>} : memref<1x4x2x128xf32, #tpu.memory_space<vmem>>, vector<1x1x2x128xf32>,
    %c0_53 = arith.constant 0 : index
    %c3_54 = arith.constant 3 : index
    %c0_55 = arith.constant 0 : index
    %c0_56 = arith.constant 0 : index
    %79 = vector.load %arg5[%c0_53, %c3_54, %c0_55, %c0_56] : memref<1x4x2x128xf32, #tpu.memory_space<vmem>>, vector<1x1x2x128xf32>
    %80 = vector.shape_cast %79 : vector<1x1x2x128xf32> to vector<2x128xf32>
    %81 = arith.addf %80, %60 : vector<2x128xf32>
    %c0_57 = arith.constant 0 : index
    %c3_58 = arith.constant 3 : index
    %c0_59 = arith.constant 0 : index
    %c0_60 = arith.constant 0 : index
    %82 = vector.load %arg5[%c0_57, %c3_58, %c0_59, %c0_60] : memref<1x4x2x128xf32, #tpu.memory_space<vmem>>, vector<1x1x2x128xf32>
    %83 = vector.shape_cast %82 : vector<1x1x2x128xf32> to vector<2x128xf32>
    %84 = vector.shape_cast %81 : vector<2x128xf32> to vector<1x1x2x128xf32>
    tpu.vector_store %arg5[%c0_57, %c3_58, %c0_59, %c0_60], %84 {strides = array<i32>} : memref<1x4x2x128xf32, #tpu.memory_space<vmem>>, vector<1x1x2x128xf32>,
    return
  }
  func.func @transform_0(%arg0: i32, %arg1: i32) -> (i32, i32, i32, i32) {
    %c0_i32 = arith.constant 0 : i32
    %c0_i32_0 = arith.constant 0 : i32
    %c0_i32_1 = arith.constant 0 : i32
    return %arg0, %c0_i32, %arg1, %c0_i32_0 : i32, i32, i32, i32
  }
  func.func @transform_1(%arg0: i32, %arg1: i32) -> (i32, i32) {
    %c0_i32 = arith.constant 0 : i32
    %c0_i32_0 = arith.constant 0 : i32
    %c0_i32_1 = arith.constant 0 : i32
    return %c0_i32, %c0_i32_0 : i32, i32
  }
  func.func @transform_2(%arg0: i32, %arg1: i32) -> i32 {
    %c0_i32 = arith.constant 0 : i32
    %c0_i32_0 = arith.constant 0 : i32
    return %c0_i32 : i32
  }
  func.func @transform_3(%arg0: i32, %arg1: i32) -> (i32, i32, i32, i32) {
    %c0_i32 = arith.constant 0 : i32
    %c0_i32_0 = arith.constant 0 : i32
    %c0_i32_1 = arith.constant 0 : i32
    %c0_i32_2 = arith.constant 0 : i32
    return %arg0, %c0_i32, %c0_i32_0, %c0_i32_1 : i32, i32, i32, i32
  }
}

</mosaic_0001>

<llo_original>
// kernel: tpu_custom_call.1
$region0: #{tpu_custom_call.1}
  #allocation0 [shape = 'u32[]', space=smem, size = 0x4, offset = 0x4, fixed_abs, tag = 'smem constant byte address 0x4 - core index']
  #allocation1 [shape = 'u32[144,128]{1,0:T(1,128)}', space=vmem, size = 0x12000, scoped, tag = 'internal scratch']
  %s0 = inlined_call_operand.hbm [shape: f32[2,4,2,128], index: 0, kind: input, shape index: {}]
  %s1 = inlined_call_operand.vmem [shape: f32[2,4], index: 1, kind: input, shape index: {}]
  %s2 = inlined_call_operand.vmem [shape: f32[2], index: 2, kind: input, shape index: {}]
  %s3 = inlined_call_operand.hbm [shape: f32[2,4,2,128], index: 3, kind: output, shape index: {}]
  %s4 = sld [smem:[#allocation0]]
  $region61: #{tpu_custom_call.1} parent=0
    _
  %s6 = ssub.s32 1, %s4
  %s7 = scalar_select 0, %s6, %s4
  $region1: #{tpu_custom_call.1} parent=0
    #allocation2 [shape = 'u8[8192]{0}', space=vmem, size = 0x2000, scoped, tag = 'input window, operand 0']
    #allocation3 [shape = 's32[2]{0}', space=sflag, size = 0x8, scoped, tag = 'scoped memory for tpu_custom_call.1']
    #allocation4 [shape = 's32[2]{0}', space=sflag, size = 0x8, scoped, tag = 'scoped memory for tpu_custom_call.1']
    #allocation5 [shape = 's32[2]{0}', space=sflag, size = 0x8, scoped, tag = 'scoped memory for tpu_custom_call.1']
    #allocation6 [shape = 'u8[1024]{0}', space=smem, size = 0x400, scoped, tag = 'input window, operand 1, single buffered']
    #allocation7 [shape = 'u8[512]{0}', space=smem, size = 0x200, scoped, tag = 'input window, operand 2, single buffered']
    #allocation8 [shape = 's32[1]{0}', space=sflag, size = 0x4, scoped, tag = 'scoped memory for tpu_custom_call.1']
    #allocation9 [shape = 'u8[8192]{0}', space=vmem, size = 0x2000, scoped, tag = 'output window, operand 0']
    %8 = vsyncpa [#allocation3], 0
    %s9 = scalar_lea.sflag [#allocation3], 1
    %10 = vsyncpa %s9, 0
    %11 = vsyncpa [#allocation5], 0
    %12 = vsyncpa [#allocation8], 0
    %13 = vsyncpa [#allocation4], 0
    %s14 = scalar_lea.sflag [#allocation4], 1
    %15 = vsyncpa %s14, 0
    loop: start=0, step=1, limit=4
    $region2: #{tpu_custom_call.1} parent=1 // loop_pre_header
      _
    $region3: #{tpu_custom_call.1} parent=1 // loop_header
      %s17 = sphi 0, %s21
      %p18 = scmp.ge.s32.totalorder %s17, 4
      %s24 = sphi 0, %s36
      %s25 = sphi 0, %s32
      %s26 = sphi 0, %s24
      %s27 = sphi 0, %s25
      %s28 = sphi 0, %s26
      %s29 = sphi 0, %s27
      %s41 = sphi 0, %s43
      %s44 = sphi 0, %s41
      %s45 = sphi 0, %s44
      %s61 = sphi 0, %s45
      %s65 = sphi 0, %s65
      %s67 = sphi 0, %s65
      %s68 = sphi 0, %s67
      %s82 = sphi 0, %s68
      %s86 = sphi 0, %s86
      %s88 = sphi 0, %s86
      %s89 = sphi 0, %s88
      %s103 = sphi 0, %s89
      %s109 = sphi 0, %s111
      %s112 = sphi 0, %s109
      %s113 = sphi 0, %s112
      %s129 = sphi 0, %s113
    $region4: #{tpu_custom_call.1} parent=1 // loop_header_branch
      %20 = sbr.rel (%p18) target = $region8
    $region5: #{tpu_custom_call.1} parent=1 // loop_body
      %s22 = ssub.s32 %s17, 1
      %s23 = ssub.s32 %s17, 2
      %s30 = sadd.s32 1, %s25
      %p31 = scmp.ge.s32.totalorder %s30, 1
      %s32 = scalar_select %p31, 0, %s30
      %s33 = sadd.s32 1, %s24
      %s34 = scalar_select %p31, %s33, %s24
      %p35 = scmp.ge.s32.totalorder %s34, 2
      %s36 = scalar_select %p35, 0, %s34
      %s37 = ssub.s32 %s24, %s36
      %s38 = ssub.s32 %s25, %s32
      %s39 = sor.u32 %s37, %s38
      %p40 = scmp.eq.s32.totalorder %s39, 0
      %s42 = sadd.s32 %s41, 1
      %s43 = scalar_select %p40, %s41, %s42
      %p46 = pneg %p40
      %p47 = scmp.eq.s32.totalorder %s17, 1
      %p48 = por %p46, %p47
      %p49 = scmp.ne.s32.totalorder %s41, %s44
      %p50 = scmp.eq.s32.totalorder %s17, 0
      %p51 = por %p49, %p50
      %p52 = scmp.ne.s32.totalorder %s41, %s44
      %p53 = scmp.eq.s32.totalorder %s22, 1
      %p54 = por %p52, %p53
      %p55 = scmp.ne.s32.totalorder %s44, %s45
      %p56 = scmp.eq.s32.totalorder %s22, 0
      %p57 = por %p55, %p56
      %p58 = scmp.ne.s32.totalorder %s44, %s45
      %p59 = scmp.eq.s32.totalorder %s23, 1
      %p60 = por %p58, %p59
      %p62 = scmp.ne.s32.totalorder %s45, %s61
      %p63 = scmp.eq.s32.totalorder %s23, 0
      %p64 = por %p62, %p63
      %s66 = sadd.s32 %s65, 1
      %p69 = scmp.eq.s32.totalorder %s17, 1
      %p70 = scmp.ne.s32.totalorder %s65, %s67
      %p71 = scmp.eq.s32.totalorder %s17, 0
      %p72 = por %p70, %p71
      %p73 = scmp.ne.s32.totalorder %s65, %s67
      %p74 = scmp.eq.s32.totalorder %s22, 1
      %p75 = por %p73, %p74
      %p76 = scmp.ne.s32.totalorder %s67, %s68
      %p77 = scmp.eq.s32.totalorder %s22, 0
      %p78 = por %p76, %p77
      %p79 = scmp.ne.s32.totalorder %s67, %s68
      %p80 = scmp.eq.s32.totalorder %s23, 1
      %p81 = por %p79, %p80
      %p83 = scmp.ne.s32.totalorder %s68, %s82
      %p84 = scmp.eq.s32.totalorder %s23, 0
      %p85 = por %p83, %p84
      %s87 = sadd.s32 %s86, 1
      %p90 = scmp.eq.s32.totalorder %s17, 1
      %p91 = scmp.ne.s32.totalorder %s86, %s88
      %p92 = scmp.eq.s32.totalorder %s17, 0
      %p93 = por %p91, %p92
      %p94 = scmp.ne.s32.totalorder %s86, %s88
      %p95 = scmp.eq.s32.totalorder %s22, 1
      %p96 = por %p94, %p95
      %p97 = scmp.ne.s32.totalorder %s88, %s89
      %p98 = scmp.eq.s32.totalorder %s22, 0
      %p99 = por %p97, %p98
      %p100 = scmp.ne.s32.totalorder %s88, %s89
      %p101 = scmp.eq.s32.totalorder %s23, 1
      %p102 = por %p100, %p101
      %p104 = scmp.ne.s32.totalorder %s89, %s103
      %p105 = scmp.eq.s32.totalorder %s23, 0
      %p106 = por %p104, %p105
      %s107 = ssub.s32 %s24, %s36
      %p108 = scmp.eq.s32.totalorder %s107, 0
      %s110 = sadd.s32 %s109, 1
      %s111 = scalar_select %p108, %s109, %s110
      %p114 = pneg %p108
      %p115 = scmp.eq.s32.totalorder %s17, 1
      %p116 = por %p114, %p115
      %p117 = scmp.ne.s32.totalorder %s109, %s112
      %p118 = scmp.eq.s32.totalorder %s17, 0
      %p119 = por %p117, %p118
      %p120 = scmp.ne.s32.totalorder %s109, %s112
      %p121 = scmp.eq.s32.totalorder %s22, 1
      %p122 = por %p120, %p121
      %p123 = scmp.ne.s32.totalorder %s112, %s113
      %p124 = scmp.eq.s32.totalorder %s22, 0
      %p125 = por %p123, %p124
      %p126 = scmp.ne.s32.totalorder %s112, %s113
      %p127 = scmp.eq.s32.totalorder %s23, 1
      %p128 = por %p126, %p127
      %p130 = scmp.ne.s32.totalorder %s113, %s129
      %p131 = scmp.eq.s32.totalorder %s23, 0
      %p132 = por %p130, %p131
      %p133 = scmp.le.s32.totalorder 1, %s17
      %p134 = scmp.lt.s32.totalorder %s17, 3
      %p135 = pnand %p133, %p134
      %p136 = pneg %p135
      // Predicated region
      $region9: #{tpu_custom_call.1} parent=5 // pred_check
        _
      $region10: #{tpu_custom_call.1} parent=5 // pred_check_branch
        %138 = sbr.rel (%p135) target = $region12
      $region11: #{tpu_custom_call.1} parent=5 // pred_region
        %s139 = ssub.s32 %s17, 1
        // Predicated region
        $region13: #{tpu_custom_call.1} parent=11 // pred_check
          %p140 = pneg %p78
        $region14: #{tpu_custom_call.1} parent=11 // pred_check_branch
          %142 = sbr.rel (%p140) target = $region16
        $region15: #{tpu_custom_call.1} parent=11 // pred_region
          %s144 = ssub.s32 32, 32
          %145 = vsyncadd [#allocation5], %s144
          %s147 = sshll.u32 %s1, 4
          %s148 = int_to_ptr.vmem [resolvable:$true] %s147
          %150 = dma.vmem_to_smem %s148, 32, [#allocation6], [#allocation5]
        $region16: #{tpu_custom_call.1} parent=11 // pred_fallthru
          _
        // Predicated region
        $region17: #{tpu_custom_call.1} parent=11 // pred_check
          %p151 = pneg %p99
        $region18: #{tpu_custom_call.1} parent=11 // pred_check_branch
          %153 = sbr.rel (%p151) target = $region20
        $region19: #{tpu_custom_call.1} parent=11 // pred_region
          %s155 = ssub.s32 16, 16
          %156 = vsyncadd [#allocation8], %s155
          %s158 = sshll.u32 %s2, 4
          %s159 = int_to_ptr.vmem [resolvable:$true] %s158
          %161 = dma.vmem_to_smem %s159, 16, [#allocation7], [#allocation8]
        $region20: #{tpu_custom_call.1} parent=11 // pred_fallthru
          _
      $region12: #{tpu_custom_call.1} parent=5 // pred_fallthru
        _
      %p162 = scmp.lt.s32.totalorder %s17, 2
      // Predicated region
      $region21: #{tpu_custom_call.1} parent=5 // pred_check
        %p163 = pneg %p162
      $region22: #{tpu_custom_call.1} parent=5 // pred_check_branch
        %165 = sbr.rel (%p163) target = $region24
      $region23: #{tpu_custom_call.1} parent=5 // pred_region
        // Predicated region
        $region25: #{tpu_custom_call.1} parent=23 // pred_check
          %p166 = pneg %p51
        $region26: #{tpu_custom_call.1} parent=23 // pred_check_branch
          %168 = sbr.rel (%p166) target = $region28
        $region27: #{tpu_custom_call.1} parent=23 // pred_region
          %s169 = sand.u32 %s41, 1
          %s170 = scalar_lea.sflag [#allocation3], %s169
          %s171 = sand.u32 %s41, 1
          %s172 = smul.addr %s171, 8
          %s173 = scalar_lea.vmem [#allocation2], %s172
          %s175 = ssub.s32 128, 128
          %176 = vsyncadd %s170, %s175
          %s177 = smul.addr %s24, 4
          %s178 = sadd.s32 %s25, %s177
          %s179 = smul.addr %s178, 32
          %s180 = scalar_lea.hbm %s0, %s179
          %s181 = sshll.u32 %s173, 4
          %s182 = int_to_ptr.vmem [resolvable:$true] %s181
          %187 = dma.hbm_to_vmem [thread:$0]  %s180, 128, %s182, %s170, 32, 32, 2
        $region28: #{tpu_custom_call.1} parent=23 // pred_fallthru
          _
      $region24: #{tpu_custom_call.1} parent=5 // pred_fallthru
        _
      %p188 = scmp.le.s32.totalorder 1, %s17
      %p189 = scmp.lt.s32.totalorder %s17, 3
      %p190 = pnand %p188, %p189
      %p191 = pneg %p190
      // Predicated region
      $region29: #{tpu_custom_call.1} parent=5 // pred_check
        _
      $region30: #{tpu_custom_call.1} parent=5 // pred_check_branch
        %193 = sbr.rel (%p190) target = $region32
      $region31: #{tpu_custom_call.1} parent=5 // pred_region
        %s194 = ssub.s32 %s17, 1
        %s195 = sand.u32 %s44, 1
        %s196 = scalar_lea.sflag [#allocation3], %s195
        %s197 = sand.u32 %s44, 1
        %s198 = smul.addr %s197, 8
        %s199 = scalar_lea.vmem [#allocation2], %s198
        // Predicated region
        $region33: #{tpu_custom_call.1} parent=31 // pred_check
          %p200 = pneg %p57
        $region34: #{tpu_custom_call.1} parent=31 // pred_check_branch
          %202 = sbr.rel (%p200) target = $region36
        $region35: #{tpu_custom_call.1} parent=31 // pred_region
          %203 = dma.done %s196, 128
        $region36: #{tpu_custom_call.1} parent=31 // pred_fallthru
          _
        // Predicated region
        $region37: #{tpu_custom_call.1} parent=31 // pred_check
          %p204 = pneg %p78
        $region38: #{tpu_custom_call.1} parent=31 // pred_check_branch
          %206 = sbr.rel (%p204) target = $region40
        $region39: #{tpu_custom_call.1} parent=31 // pred_region
          %207 = dma.done [#allocation5], 32
        $region40: #{tpu_custom_call.1} parent=31 // pred_fallthru
          _
        // Predicated region
        $region41: #{tpu_custom_call.1} parent=31 // pred_check
          %p208 = pneg %p99
        $region42: #{tpu_custom_call.1} parent=31 // pred_check_branch
          %210 = sbr.rel (%p208) target = $region44
        $region43: #{tpu_custom_call.1} parent=31 // pred_region
          %211 = dma.done [#allocation8], 16
        $region44: #{tpu_custom_call.1} parent=31 // pred_fallthru
          _
        %212 = sfence
        %s213 = sand.u32 %s44, 1
        %s214 = scalar_lea.sflag [#allocation3], %s213
        %s215 = sand.u32 %s44, 1
        %s216 = smul.addr %s215, 8
        %s217 = scalar_lea.vmem [#allocation2], %s216
        %p218 = pneg %p57
        %p219 = pneg %p54
        %p220 = pneg %p78
        %p221 = pneg %p75
        %p222 = pneg %p99
        %p223 = pneg %p96
        %p224 = pneg %p125
        %p225 = pneg %p122
        %s226 = sand.u32 %s112, 1
        %s227 = scalar_lea.sflag [#allocation4], %s226
        %s228 = sand.u32 %s112, 1
        %s229 = smul.addr %s228, 8
        %s230 = scalar_lea.vmem [#allocation9], %s229
        %p231 = scmp.eq.s32.totalorder %s27, 0
        // Predicated region
        $region45: #{tpu_custom_call.1} parent=31 // pred_check
          %p232 = pneg %p231
        $region46: #{tpu_custom_call.1} parent=31 // pred_check_branch
          %234 = sbr.rel (%p232) target = $region48
        $region47: #{tpu_custom_call.1} parent=31 // pred_region
          %235 = vst [vmem:[%s230] sm:$0x3] 0.0
          %236 = vst [vmem:[%s230 + $0x2] sm:$0x3] 0.0
          %237 = vst [vmem:[%s230 + $0x4] sm:$0x3] 0.0
          %238 = vst [vmem:[%s230 + $0x6] sm:$0x3] 0.0
        $region48: #{tpu_custom_call.1} parent=31 // pred_fallthru
          _
        %s239 = sld [smem:[#allocation6]]
        %s240 = sld [smem:[#allocation6 + $0x1]]
        %s241 = sld [smem:[#allocation6 + $0x2]]
        %s242 = sld [smem:[#allocation6 + $0x3]]
        %s243 = sld [smem:[#allocation6 + $0x80]]
        %s244 = sld [smem:[#allocation6 + $0x81]]
        %s245 = sld [smem:[#allocation6 + $0x82]]
        %s246 = sld [smem:[#allocation6 + $0x83]]
        %s247 = sld [smem:[#allocation7]]
        %s248 = sld [smem:[#allocation7 + $0x1]]
        %v249 = vld [vmem:[%s199] sm:$0x3]
        %s250 = sadd.s32 0, 2
        %s251 = scalar_lea.vmem %s199, %s250 [#allocation2]
        %v252 = vld [vmem:[%s251] sm:$0x3]
        %s253 = sadd.s32 0, 4
        %s254 = scalar_lea.vmem %s199, %s253 [#allocation2]
        %v255 = vld [vmem:[%s254] sm:$0x3]
        %s256 = sadd.s32 0, 6
        %s257 = scalar_lea.vmem %s199, %s256 [#allocation2]
        %v258 = vld [vmem:[%s257] sm:$0x3]
        %v259 = vstv %s239
        %v260 = vmul.f32 %v249, %v259
        %v261 = vstv %s240
        %v262 = vmul.f32 %v252, %v261
        %v263 = vadd.f32 %v260, %v262
        %v264 = vstv %s241
        %v265 = vmul.f32 %v255, %v264
        %v266 = vadd.f32 %v263, %v265
        %v267 = vstv %s242
        %v268 = vmul.f32 %v258, %v267
        %v269 = vadd.f32 %v266, %v268
        %v270 = vstv %s247
        %v271 = vadd.f32 %v269, %v270
        %v272 = vadd.f32 %v271, 0.0
        %v273 = vmul.f32 %v271, %v271
        %v274 = vadd.f32 %v273, 0.0
        %v275 = vstv %s243
        %v276 = vmul.f32 %v249, %v275
        %v277 = vstv %s244
        %v278 = vmul.f32 %v252, %v277
        %v279 = vadd.f32 %v276, %v278
        %v280 = vstv %s245
        %v281 = vmul.f32 %v255, %v280
        %v282 = vadd.f32 %v279, %v281
        %v283 = vstv %s246
        %v284 = vmul.f32 %v258, %v283
        %v285 = vadd.f32 %v282, %v284
        %v286 = vstv %s248
        %v287 = vadd.f32 %v285, %v286
        %v288 = vadd.f32 %v287, 0.0
        %v289 = vmul.f32 %v287, %v287
        %v290 = vadd.f32 %v289, 0.0
        %v291 = vld [vmem:[%s230] sm:$0x3]
        %v292 = vadd.f32 %v291, %v272
        %293 = vst [vmem:[%s230] sm:$0x3] %v292
        %s294 = scalar_lea.vmem %s230, 4 [#allocation9]
        %v295 = vld [vmem:[%s294] sm:$0x3]
        %v296 = vadd.f32 %v295, %v274
        %297 = vst [vmem:[%s294] sm:$0x3] %v296
        %s298 = scalar_lea.vmem %s230, 2 [#allocation9]
        %v299 = vld [vmem:[%s298] sm:$0x3]
        %v300 = vadd.f32 %v299, %v288
        %301 = vst [vmem:[%s298] sm:$0x3] %v300
        %s302 = scalar_lea.vmem %s230, 6 [#allocation9]
        %v303 = vld [vmem:[%s302] sm:$0x3]
        %v304 = vadd.f32 %v303, %v290
        %305 = vst [vmem:[%s302] sm:$0x3] %v304
        %s306 = sand.u32 %s112, 1
        %s307 = scalar_lea.sflag [#allocation4], %s306
        %s308 = sand.u32 %s112, 1
        %s309 = smul.addr %s308, 8
        %s310 = scalar_lea.vmem [#allocation9], %s309
        // Predicated region
        $region49: #{tpu_custom_call.1} parent=31 // pred_check
          %p311 = pneg %p122
        $region50: #{tpu_custom_call.1} parent=31 // pred_check_branch
          %313 = sbr.rel (%p311) target = $region52
        $region51: #{tpu_custom_call.1} parent=31 // pred_region
          %s315 = ssub.s32 128, 128
          %316 = vsyncadd %s307, %s315
          %s317 = smul.addr %s26, 4
          %s318 = smul.addr %s317, 32
          %s319 = scalar_lea.hbm %s3, %s318
          %s320 = sshll.u32 %s310, 4
          %s321 = int_to_ptr.vmem [resolvable:$true] %s320
          %326 = dma.vmem_to_hbm [thread:$0]  %s321, 128, %s319, %s307, 32, 32, 2
        $region52: #{tpu_custom_call.1} parent=31 // pred_fallthru
          _
      $region32: #{tpu_custom_call.1} parent=5 // pred_fallthru
        _
      %p327 = scmp.le.s32.totalorder 2, %s17
      // Predicated region
      $region53: #{tpu_custom_call.1} parent=5 // pred_check
        %p328 = pneg %p327
      $region54: #{tpu_custom_call.1} parent=5 // pred_check_branch
        %330 = sbr.rel (%p328) target = $region56
      $region55: #{tpu_custom_call.1} parent=5 // pred_region
        %s331 = ssub.s32 %s17, 2
        // Predicated region
        $region57: #{tpu_custom_call.1} parent=55 // pred_check
          %p332 = pneg %p128
        $region58: #{tpu_custom_call.1} parent=55 // pred_check_branch
          %334 = sbr.rel (%p332) target = $region60
        $region59: #{tpu_custom_call.1} parent=55 // pred_region
          %s335 = sand.u32 %s113, 1
          %s336 = scalar_lea.sflag [#allocation4], %s335
          %s337 = sand.u32 %s113, 1
          %s338 = smul.addr %s337, 8
          %s339 = scalar_lea.vmem [#allocation9], %s338
          %340 = dma.done %s336, 128
        $region60: #{tpu_custom_call.1} parent=55 // pred_fallthru
          _
      $region56: #{tpu_custom_call.1} parent=5 // pred_fallthru
        _
    $region6: #{tpu_custom_call.1} parent=1 // loop_footer
      %s21 = sadd.s32 1, %s17
    $region7: #{tpu_custom_call.1} parent=1 // loop_footer_branch
      %16 = sbr.rel target = $region3
    $region8: #{tpu_custom_call.1} parent=1 // loop_exit
      _
    %341 = vsyncpa [#allocation3], 1
    %s342 = scalar_lea.sflag [#allocation3], 1
    %343 = vsyncpa %s342, 1
    %344 = vsyncpa [#allocation4], 1
    %s345 = scalar_lea.sflag [#allocation4], 1
    %346 = vsyncpa %s345, 1
    %347 = vsyncpa [#allocation5], 1
    %s348 = scalar_lea.sflag [#allocation5], 1
    %349 = vsyncpa %s348, 1
    %350 = vsyncpa [#allocation8], 1

</llo_original>
